<compile_context>
chip_gen: v7x
topology: tpu7x:2x2x1
jax: 0.10.0
libtpu: 0.0.40
codegen_flags: <defaults>
</compile_context>

<pallas_src>
import functools

import jax
import jax.numpy as jnp
from jax.experimental import pallas as pl
from jax.experimental.pallas import tpu as pltpu

HIDDEN = 64          # logical hidden width (PyTorch module)
HIDDEN_PAD = 128     # lane-dense padded hidden width
ACTION_PAD = 8       # padded output width (>= action_size, small to cut HBM writeback)
TILE_CAP = 512       # max batch rows per grid step


def mlp_kernel(x_ref, w1_ref, b1_ref, w2_ref, b2_ref, w3_ref, b3_ref, out_ref,
               *, mxu_dtype):
    x = x_ref[...]                                   # (TB, S) with S tiny (2 here)
    w1 = w1_ref[...]                                 # (S, H)

    # fc1 via VPU broadcast-FMAs: K = S is tiny, so an MXU pass would be ~99% padding.
    h1 = b1_ref[...] + x[:, 0:1] * w1[0:1, :]        # (1,H) + (TB,1)*(1,H) -> (TB,H)
    for s in range(1, x.shape[1]):                   # static, unrolled at trace time
        h1 = h1 + x[:, s:s + 1] * w1[s:s + 1, :]
    h1 = jnp.maximum(h1, 0.0)                        # ReLU

    # fc2 / fc3 on the MXU, f32 accumulation.  mxu_dtype is f32 (exact, default) or
    # bf16 (v6e/v7x fast path); astype is a no-op for f32.
    h2 = jnp.dot(h1.astype(mxu_dtype), w2_ref[...].astype(mxu_dtype),
                 preferred_element_type=jnp.float32) + b2_ref[...]
    h2 = jnp.maximum(h2, 0.0)                        # ReLU
    q = jnp.dot(h2.astype(mxu_dtype), w3_ref[...].astype(mxu_dtype),
                preferred_element_type=jnp.float32) + b3_ref[...]

    out_ref[...] = q.astype(out_ref.dtype)           # (TB, A_pad)


def _round_up(x, m):
    return ((x + m - 1) // m) * m


def _pick_tile(b_work, cap):
    """Batch tile: big to amortize per-grid-step overhead, but split in two at
    mid/large batches so a v7x 'parallel' grid keeps both TensorCores busy."""
    if b_work <= cap:
        if b_work >= 256:
            return min(cap, _round_up((b_work + 1) // 2, 8))
        return b_work
    return cap


@functools.partial(jax.jit,
                   static_argnames=("action_size", "tile_cap", "use_bf16_mxu"))
def network_forward(state, params, action_size, *, tile_cap=TILE_CAP,
                    use_bf16_mxu=False):
    """state: (B, state_size) f32 -> Q-values (B, action_size) f32."""
    w1, b1, w2, b2, w3, b3 = (params["w1"], params["b1"], params["w2"],
                              params["b2"], params["w3"], params["b3"])
    B, S = state.shape
    H = w2.shape[0]            # padded hidden (128)
    A_pad = w3.shape[1]        # padded output (8)

    # Tiny pad to a multiple of 8 rows only when needed (e.g. B=1 acting path).
    # Padded rows are finite junk (zeros -> bias) and are sliced away below.
    b_work = _round_up(B, 8)
    if b_work != B:
        state = jnp.pad(state, ((0, b_work - B), (0, 0)))

    tile_b = _pick_tile(b_work, tile_cap)
    grid = (pl.cdiv(b_work, tile_b),)   # partial edge block handled by Pallas

    # Advisory cost estimate so XLA can schedule/overlap this small custom call.
    flops = 2 * b_work * (S * H + H * H + H * A_pad)
    bytes_accessed = 4 * (b_work * S + S * H + H + H * H + H + H * A_pad + A_pad
                          + b_work * A_pad)
    cost = pl.CostEstimate(flops=flops, transcendentals=0,
                           bytes_accessed=bytes_accessed)

    kernel = functools.partial(
        mlp_kernel,
        mxu_dtype=jnp.bfloat16 if use_bf16_mxu else jnp.float32)

    out = pl.pallas_call(
        kernel,
        out_shape=jax.ShapeDtypeStruct((b_work, A_pad), jnp.float32),
        grid=grid,
        in_specs=[
            pl.BlockSpec((tile_b, S), lambda i: (i, 0)),   # batch tile of states
            pl.BlockSpec((S, H),      lambda i: (0, 0)),   # weights resident in VMEM
            pl.BlockSpec((1, H),      lambda i: (0, 0)),
            pl.BlockSpec((H, H),      lambda i: (0, 0)),
            pl.BlockSpec((1, H),      lambda i: (0, 0)),
            pl.BlockSpec((H, A_pad),  lambda i: (0, 0)),
            pl.BlockSpec((1, A_pad),  lambda i: (0, 0)),
        ],
        out_specs=pl.BlockSpec((tile_b, A_pad), lambda i: (i, 0)),
        compiler_params=pltpu.CompilerParams(
            dimension_semantics=("parallel",),
            vmem_limit_bytes=32 * 1024 * 1024),   # guard: well under v7x's 64 MiB
        cost_estimate=cost,
    )(state, w1, b1, w2, b2, w3, b3)

    return out[:B, :action_size]


def init_params(key, state_size, action_size, hidden=HIDDEN):
    """PyTorch-style init U(-1/sqrt(fan_in), 1/sqrt(fan_in)) at the *logical* sizes,
    then zero-padded (hidden -> 128, actions -> 8).  Zero padding is exact: padded
    hidden units get zero weight+bias, ReLU(0)=0, and padded rows of the next layer's
    weights are zero, so they contribute nothing."""
    def linear(key, fan_in, fan_out, pad_in, pad_out):
        kw, kb = jax.random.split(key)
        bound = 1.0 / jnp.sqrt(fan_in)
        w = jax.random.uniform(kw, (fan_in, fan_out), jnp.float32, -bound, bound)
        b = jax.random.uniform(kb, (fan_out,), jnp.float32, -bound, bound)
        w = jnp.pad(w, ((0, pad_in - fan_in), (0, pad_out - fan_out)))
        b = jnp.pad(b, (0, pad_out - fan_out)).reshape(1, pad_out)
        return w, b

    k1, k2, k3 = jax.random.split(key, 3)
    w1, b1 = linear(k1, state_size, hidden, state_size, HIDDEN_PAD)
    w2, b2 = linear(k2, hidden, hidden, HIDDEN_PAD, HIDDEN_PAD)
    w3, b3 = linear(k3, hidden, action_size, HIDDEN_PAD, ACTION_PAD)
    return {"w1": w1, "b1": b1, "w2": w2, "b2": b2, "w3": w3, "b3": b3}


def jax_reference(state, params, action_size):
    h1 = jnp.maximum(state @ params["w1"] + params["b1"], 0.0)
    h2 = jnp.maximum(h1 @ params["w2"] + params["b2"], 0.0)
    return (h2 @ params["w3"] + params["b3"])[:, :action_size]


if __name__ == "__main__":
    # MountainCar-v0: observation dim = 2, action dim = 3.
    state_size, action_size = 2, 3

    key = jax.random.PRNGKey(0)
    k_params, k_small, k_big, k_edge = jax.random.split(key, 4)
    params = init_params(k_params, state_size, action_size)

    # Small batch (single-step acting path): one small grid step.
    state_small = jax.random.normal(k_small, (8, state_size), jnp.float32)
    q_small = jax.block_until_ready(network_forward(state_small, params, action_size))
    ref_small = jax_reference(state_small, params, action_size)
    assert q_small.shape == (8, action_size)
    assert jnp.allclose(q_small, ref_small, atol=1e-4, rtol=1e-5), "small-batch mismatch"

    # Replay-buffer batch: grid splits in two (keeps both v7x TCs busy).
    state_big = jax.random.normal(k_big, (256, state_size), jnp.float32)
    q_big = jax.block_until_ready(network_forward(state_big, params, action_size))
    ref_big = jax_reference(state_big, params, action_size)
    assert q_big.shape == (256, action_size)
    assert jnp.allclose(q_big, ref_big, atol=1e-4, rtol=1e-5), "big-batch mismatch"

    # Non-divisible batch: exercises the partial edge block (no wrapper-side big pad).
    state_edge = jax.random.normal(k_edge, (1000, state_size), jnp.float32)
    q_edge = jax.block_until_ready(network_forward(state_edge, params, action_size))
    ref_edge = jax_reference(state_edge, params, action_size)
    assert q_edge.shape == (1000, action_size)
    assert jnp.allclose(q_edge, ref_edge, atol=1e-4, rtol=1e-5), "edge-batch mismatch"

    # bf16 MXU-input fast path (v6e/v7x); f32 accumulation, looser tolerance.
    q_bf16 = jax.block_until_ready(
        network_forward(state_big, params, action_size, use_bf16_mxu=True))
    assert q_bf16.shape == (256, action_size)
    assert jnp.allclose(q_bf16, ref_big, atol=5e-2, rtol=5e-2), "bf16 mismatch"

    print("KERNEL_OK")
</pallas_src>

<mosaic_0001>
module attributes {stable_mosaic.version = 11 : i64} {
  func.func @mlp_kernel(%arg0: i32, %arg1: memref<8x2xf32, #tpu.memory_space<vmem>>, %arg2: memref<2x128xf32, #tpu.memory_space<vmem>>, %arg3: memref<1x128xf32, #tpu.memory_space<vmem>>, %arg4: memref<128x128xf32, #tpu.memory_space<vmem>>, %arg5: memref<1x128xf32, #tpu.memory_space<vmem>>, %arg6: memref<128x8xf32, #tpu.memory_space<vmem>>, %arg7: memref<1x8xf32, #tpu.memory_space<vmem>>, %arg8: memref<8x8xf32, #tpu.memory_space<vmem>>) attributes {dimension_semantics = [#tpu.dimension_semantics<parallel>], iteration_bounds = array<i64: 1>, scalar_prefetch = 0 : i64, scratch_operands = 0 : i64, tpu.core_type = #tpu.core_type<tc>, window_params = [{transform_indices = @transform_0, window_bounds = array<i64: 8, 2>}, {pipeline_mode = #tpu.pipeline_mode<synchronous>, transform_indices = @transform_1, window_bounds = array<i64: 2, 128>}, {pipeline_mode = #tpu.pipeline_mode<synchronous>, transform_indices = @transform_2, window_bounds = array<i64: 1, 128>}, {pipeline_mode = #tpu.pipeline_mode<synchronous>, transform_indices = @transform_3, window_bounds = array<i64: 128, 128>}, {pipeline_mode = #tpu.pipeline_mode<synchronous>, transform_indices = @transform_4, window_bounds = array<i64: 1, 128>}, {pipeline_mode = #tpu.pipeline_mode<synchronous>, transform_indices = @transform_5, window_bounds = array<i64: 128, 8>}, {pipeline_mode = #tpu.pipeline_mode<synchronous>, transform_indices = @transform_6, window_bounds = array<i64: 1, 8>}, {transform_indices = @transform_7, window_bounds = array<i64: 8, 8>}]} {
    %c0 = arith.constant 0 : index
    %c0_0 = arith.constant 0 : index
    %0 = vector.load %arg1[%c0, %c0_0] : memref<8x2xf32, #tpu.memory_space<vmem>>, vector<8x2xf32>
    %c0_1 = arith.constant 0 : index
    %c0_2 = arith.constant 0 : index
    %1 = vector.load %arg2[%c0_1, %c0_2] : memref<2x128xf32, #tpu.memory_space<vmem>>, vector<2x128xf32>
    %c0_3 = arith.constant 0 : index
    %c0_4 = arith.constant 0 : index
    %2 = vector.load %arg3[%c0_3, %c0_4] : memref<1x128xf32, #tpu.memory_space<vmem>>, vector<1x128xf32>
    %3 = vector.extract_strided_slice %0 {offsets = [0, 0], sizes = [8, 1], strides = [1, 1]} : vector<8x2xf32> to vector<8x1xf32>
    %4 = vector.extract_strided_slice %1 {offsets = [0, 0], sizes = [1, 128], strides = [1, 1]} : vector<2x128xf32> to vector<1x128xf32>
    %5 = vector.broadcast %3 : vector<8x1xf32> to vector<8x128xf32>
    %6 = vector.broadcast %4 : vector<1x128xf32> to vector<8x128xf32>
    %7 = arith.mulf %5, %6 : vector<8x128xf32>
    %8 = vector.broadcast %2 : vector<1x128xf32> to vector<8x128xf32>
    %9 = arith.addf %8, %7 : vector<8x128xf32>
    %10 = vector.extract_strided_slice %0 {offsets = [0, 1], sizes = [8, 1], strides = [1, 1]} : vector<8x2xf32> to vector<8x1xf32>
    %11 = vector.extract_strided_slice %1 {offsets = [1, 0], sizes = [1, 128], strides = [1, 1]} : vector<2x128xf32> to vector<1x128xf32>
    %12 = vector.broadcast %10 : vector<8x1xf32> to vector<8x128xf32>
    %13 = vector.broadcast %11 : vector<1x128xf32> to vector<8x128xf32>
    %14 = arith.mulf %12, %13 : vector<8x128xf32>
    %15 = arith.addf %9, %14 : vector<8x128xf32>
    %cst = arith.constant 0.000000e+00 : f32
    %16 = vector.broadcast %cst : f32 to vector<8x128xf32>
    %17 = arith.maximumf %15, %16 : vector<8x128xf32>
    %c0_5 = arith.constant 0 : index
    %c0_6 = arith.constant 0 : index
    %18 = vector.load %arg4[%c0_5, %c0_6] : memref<128x128xf32, #tpu.memory_space<vmem>>, vector<128x128xf32>
    %cst_7 = arith.constant dense<0.000000e+00> : vector<8x128xf32>
    %19 = tpu.matmul %17, %18, %cst_7 {dimension_numbers = #tpu.dot_dimension_numbers<[1], [0], [0], [1], [0, 0, 1, 1], [], []>} : vector<8x128xf32>, vector<128x128xf32>, vector<8x128xf32> -> vector<8x128xf32>
    %c0_8 = arith.constant 0 : index
    %c0_9 = arith.constant 0 : index
    %20 = vector.load %arg5[%c0_8, %c0_9] : memref<1x128xf32, #tpu.memory_space<vmem>>, vector<1x128xf32>
    %21 = vector.broadcast %20 : vector<1x128xf32> to vector<8x128xf32>
    %22 = arith.addf %19, %21 : vector<8x128xf32>
    %cst_10 = arith.constant 0.000000e+00 : f32
    %23 = vector.broadcast %cst_10 : f32 to vector<8x128xf32>
    %24 = arith.maximumf %22, %23 : vector<8x128xf32>
    %c0_11 = arith.constant 0 : index
    %c0_12 = arith.constant 0 : index
    %25 = vector.load %arg6[%c0_11, %c0_12] : memref<128x8xf32, #tpu.memory_space<vmem>>, vector<128x8xf32>
    %cst_13 = arith.constant dense<0.000000e+00> : vector<8x8xf32>
    %26 = tpu.matmul %24, %25, %cst_13 {dimension_numbers = #tpu.dot_dimension_numbers<[1], [0], [0], [1], [0, 0, 1, 1], [], []>} : vector<8x128xf32>, vector<128x8xf32>, vector<8x8xf32> -> vector<8x8xf32>
    %c0_14 = arith.constant 0 : index
    %c0_15 = arith.constant 0 : index
    %27 = vector.load %arg7[%c0_14, %c0_15] : memref<1x8xf32, #tpu.memory_space<vmem>>, vector<1x8xf32>
    %28 = vector.broadcast %27 : vector<1x8xf32> to vector<8x8xf32>
    %29 = arith.addf %26, %28 : vector<8x8xf32>
    %c0_16 = arith.constant 0 : index
    %c0_17 = arith.constant 0 : index
    %30 = vector.load %arg8[%c0_16, %c0_17] : memref<8x8xf32, #tpu.memory_space<vmem>>, vector<8x8xf32>
    tpu.vector_store %arg8[%c0_16, %c0_17], %29 {strides = array<i32>} : memref<8x8xf32, #tpu.memory_space<vmem>>, vector<8x8xf32>,
    return
  }
  func.func @transform_0(%arg0: i32) -> (i32, i32) {
    %c0_i32 = arith.constant 0 : i32
    %c0_i32_0 = arith.constant 0 : i32
    return %arg0, %c0_i32 : i32, i32
  }
  func.func @transform_1(%arg0: i32) -> (i32, i32) {
    %c0_i32 = arith.constant 0 : i32
    %c0_i32_0 = arith.constant 0 : i32
    %c0_i32_1 = arith.constant 0 : i32
    return %c0_i32, %c0_i32_0 : i32, i32
  }
  func.func @transform_2(%arg0: i32) -> (i32, i32) {
    %c0_i32 = arith.constant 0 : i32
    %c0_i32_0 = arith.constant 0 : i32
    %c0_i32_1 = arith.constant 0 : i32
    return %c0_i32, %c0_i32_0 : i32, i32
  }
  func.func @transform_3(%arg0: i32) -> (i32, i32) {
    %c0_i32 = arith.constant 0 : i32
    %c0_i32_0 = arith.constant 0 : i32
    %c0_i32_1 = arith.constant 0 : i32
    return %c0_i32, %c0_i32_0 : i32, i32
  }
  func.func @transform_4(%arg0: i32) -> (i32, i32) {
    %c0_i32 = arith.constant 0 : i32
    %c0_i32_0 = arith.constant 0 : i32
    %c0_i32_1 = arith.constant 0 : i32
    return %c0_i32, %c0_i32_0 : i32, i32
  }
  func.func @transform_5(%arg0: i32) -> (i32, i32) {
    %c0_i32 = arith.constant 0 : i32
    %c0_i32_0 = arith.constant 0 : i32
    %c0_i32_1 = arith.constant 0 : i32
    return %c0_i32, %c0_i32_0 : i32, i32
  }
  func.func @transform_6(%arg0: i32) -> (i32, i32) {
    %c0_i32 = arith.constant 0 : i32
    %c0_i32_0 = arith.constant 0 : i32
    %c0_i32_1 = arith.constant 0 : i32
    return %c0_i32, %c0_i32_0 : i32, i32
  }
  func.func @transform_7(%arg0: i32) -> (i32, i32) {
    %c0_i32 = arith.constant 0 : i32
    %c0_i32_0 = arith.constant 0 : i32
    return %arg0, %c0_i32 : i32, i32
  }
}

</mosaic_0001>

<llo_original>
// kernel: network_forward.1
$region0: #{network_forward.1}
  #allocation0 [shape = 'u32[]', space=smem, size = 0x4, offset = 0x4, fixed_abs, tag = 'smem constant byte address 0x4 - core index']
  #allocation1 [shape = 'u32[144,128]{1,0:T(1,128)}', space=vmem, size = 0x12000, scoped, tag = 'internal scratch']
  %s0 = inlined_call_operand.vmem [shape: f32[8,2], index: 0, kind: input, shape index: {}]
  %s1 = inlined_call_operand.vmem [shape: f32[2,128], index: 1, kind: input, shape index: {}]
  %s2 = inlined_call_operand.vmem [shape: f32[1,128], index: 2, kind: input, shape index: {}]
  %s3 = inlined_call_operand.vmem [shape: f32[128,128], index: 3, kind: input, shape index: {}]
  %s4 = inlined_call_operand.vmem [shape: f32[1,128], index: 4, kind: input, shape index: {}]
  %s5 = inlined_call_operand.vmem [shape: f32[128,8], index: 5, kind: input, shape index: {}]
  %s6 = inlined_call_operand.vmem [shape: f32[1,8], index: 6, kind: input, shape index: {}]
  %s7 = inlined_call_operand.vmem [shape: f32[8,8], index: 7, kind: output, shape index: {}]
  %s8 = sld [smem:[#allocation0]]
  $region38: #{network_forward.1} parent=0
    _
  %s10 = ssub.s32 1, %s8
  %s11 = scalar_select 0, %s10, %s8
  // Predicated region
  $region2: #{network_forward.1} parent=0 // pred_check
    _
  $region3: #{network_forward.1} parent=0 // pred_check_branch
    %13 = sbr.rel (0) target = $region5
  $region4: #{network_forward.1} parent=0 // pred_region
    _
  $region5: #{network_forward.1} parent=0 // pred_fallthru
    _
  // Predicated region
  $region6: #{network_forward.1} parent=0 // pred_check
    _
  $region7: #{network_forward.1} parent=0 // pred_check_branch
    %15 = sbr.rel (0) target = $region9
  $region8: #{network_forward.1} parent=0 // pred_region
    _
  $region9: #{network_forward.1} parent=0 // pred_fallthru
    _
  // Predicated region
  $region10: #{network_forward.1} parent=0 // pred_check
    _
  $region11: #{network_forward.1} parent=0 // pred_check_branch
    %17 = sbr.rel (0) target = $region13
  $region12: #{network_forward.1} parent=0 // pred_region
    _
  $region13: #{network_forward.1} parent=0 // pred_fallthru
    _
  // Predicated region
  $region14: #{network_forward.1} parent=0 // pred_check
    _
  $region15: #{network_forward.1} parent=0 // pred_check_branch
    %19 = sbr.rel (0) target = $region17
  $region16: #{network_forward.1} parent=0 // pred_region
    _
  $region17: #{network_forward.1} parent=0 // pred_fallthru
    _
  // Predicated region
  $region18: #{network_forward.1} parent=0 // pred_check
    _
  $region19: #{network_forward.1} parent=0 // pred_check_branch
    %21 = sbr.rel (0) target = $region21
  $region20: #{network_forward.1} parent=0 // pred_region
    _
  $region21: #{network_forward.1} parent=0 // pred_fallthru
    _
  // Predicated region
  $region22: #{network_forward.1} parent=0 // pred_check
    _
  $region23: #{network_forward.1} parent=0 // pred_check_branch
    %23 = sbr.rel (0) target = $region25
  $region24: #{network_forward.1} parent=0 // pred_region
    _
  $region25: #{network_forward.1} parent=0 // pred_fallthru
    _
  // Predicated region
  $region26: #{network_forward.1} parent=0 // pred_check
    _
  $region27: #{network_forward.1} parent=0 // pred_check_branch
    %25 = sbr.rel (0) target = $region29
  $region28: #{network_forward.1} parent=0 // pred_region
    _
  $region29: #{network_forward.1} parent=0 // pred_fallthru
    _
  %v26 = vld [vmem:[%s0] sm:$0xff]
  %v27 = vld [vmem:[%s1] sm:$0x3]
  %v28 = vld [vmem:[%s2] sm:$0x1]
  %30 = vset.pattern.permute.xlu0 0
  %31 = vperm.xlu0 %30, %v26
  %v32 = vpop.permute.xlu0 %31
  %v34 = vlaneseq
  %v35 = vshrl.u32 %v34, 7
  %v36 = vsub.s32 0, %v35
  %v37 = vrot.slane %v27, %v36
  %v38 = vmul.f32 %v32, %v37
  %v40 = vlaneseq
  %v41 = vshrl.u32 %v40, 7
  %v42 = vsub.s32 0, %v41
  %v43 = vrot.slane %v28, %v42
  %v45 = vadd.f32 %v43, %v38
  %46 = vset.pattern.permute.xlu0 1
  %47 = vperm.xlu0 %46, %v26
  %v48 = vpop.permute.xlu0 %47
  %v50 = vlaneseq
  %v51 = vshrl.u32 %v50, 7
  %v52 = vsub.s32 1, %v51
  %v53 = vrot.slane %v27, %v52
  %v54 = vmul.f32 %v48, %v53
  %v55 = vadd.f32 %v45, %v54
  %v56 = vmax.f32 %v55, 0.0
  %v57 = vld [vmem:[%s3] sm:$0xff]
  %v58 = vld [vmem:[%s3 + $0x8] sm:$0xff]
  %v59 = vld [vmem:[%s3 + $0x10] sm:$0xff]
  %v60 = vld [vmem:[%s3 + $0x18] sm:$0xff]
  %v61 = vld [vmem:[%s3 + $0x20] sm:$0xff]
  %v62 = vld [vmem:[%s3 + $0x28] sm:$0xff]
  %v63 = vld [vmem:[%s3 + $0x30] sm:$0xff]
  %v64 = vld [vmem:[%s3 + $0x38] sm:$0xff]
  %v65 = vld [vmem:[%s3 + $0x40] sm:$0xff]
  %v66 = vld [vmem:[%s3 + $0x48] sm:$0xff]
  %v67 = vld [vmem:[%s3 + $0x50] sm:$0xff]
  %v68 = vld [vmem:[%s3 + $0x58] sm:$0xff]
  %v69 = vld [vmem:[%s3 + $0x60] sm:$0xff]
  %v70 = vld [vmem:[%s3 + $0x68] sm:$0xff]
  %v71 = vld [vmem:[%s3 + $0x70] sm:$0xff]
  %v72 = vld [vmem:[%s3 + $0x78] sm:$0xff]
  %v73 = vld [vmem:[%s4] sm:$0x1]
  %v75 = vlaneseq
  %v76 = vshrl.u32 %v75, 7
  %v77 = vsub.s32 0, %v76
  %v78 = vrot.slane %v73, %v77
  %80 = vmatprep.subr.mxu0 0.0
  %81 = vmatpush1.msra.mxu0 %v57
  %82 = vmatprep.subr.mxu0 0.0
  %83 = vmatpush1.msra.mxu0 %v58
  %84 = vmatprep.subr.mxu0 0.0
  %85 = vmatpush1.msra.mxu0 %v59
  %86 = vmatprep.subr.mxu0 0.0
  %87 = vmatpush1.msra.mxu0 %v60
  %88 = vmatprep.subr.mxu0 0.0
  %89 = vmatpush1.msra.mxu0 %v61
  %90 = vmatprep.subr.mxu0 0.0
  %91 = vmatpush1.msra.mxu0 %v62
  %92 = vmatprep.subr.mxu0 0.0
  %93 = vmatpush1.msra.mxu0 %v63
  %94 = vmatprep.subr.mxu0 0.0
  %95 = vmatpush1.msra.mxu0 %v64
  %96 = vmatprep.subr.mxu0 0.0
  %97 = vmatpush1.msra.mxu0 %v65
  %98 = vmatprep.subr.mxu0 0.0
  %99 = vmatpush1.msra.mxu0 %v66
  %100 = vmatprep.subr.mxu0 0.0
  %101 = vmatpush1.msra.mxu0 %v67
  %102 = vmatprep.subr.mxu0 0.0
  %103 = vmatpush1.msra.mxu0 %v68
  %104 = vmatprep.subr.mxu0 0.0
  %105 = vmatpush1.msra.mxu0 %v69
  %106 = vmatprep.subr.mxu0 0.0
  %107 = vmatpush1.msra.mxu0 %v70
  %108 = vmatprep.subr.mxu0 0.0
  %109 = vmatpush1.msra.mxu0 %v71
  %110 = vmatprep.subr.mxu0 0.0
  %111 = vmatpush1.msra.mxu0 %v72
  %112 = vmatprep.subr.mxu0 0.0
  %113 = vmatpush1.msra.mxu0 0.0
  %114 = vmatprep.subr.mxu0 0.0
  %115 = vmatpush1.msra.mxu0 0.0
  %116 = vmatprep.subr.mxu0 0.0
  %117 = vmatpush1.msra.mxu0 0.0
  %118 = vmatprep.subr.mxu0 0.0
  %119 = vmatpush1.msra.mxu0 0.0
  %120 = vmatprep.subr.mxu0 0.0
  %121 = vmatpush1.msra.mxu0 0.0
  %122 = vmatprep.subr.mxu0 0.0
  %123 = vmatpush1.msra.mxu0 0.0
  %124 = vmatprep.subr.mxu0 0.0
  %125 = vmatpush1.msra.mxu0 0.0
  %126 = vmatprep.subr.mxu0 0.0
  %127 = vmatpush1.msra.mxu0 0.0
  %128 = vmatprep.subr.mxu0 0.0
  %129 = vmatpush1.msra.mxu0 0.0
  %130 = vmatprep.subr.mxu0 0.0
  %131 = vmatpush1.msra.mxu0 0.0
  %132 = vmatprep.subr.mxu0 0.0
  %133 = vmatpush1.msra.mxu0 0.0
  %134 = vmatprep.subr.mxu0 0.0
  %135 = vmatpush1.msra.mxu0 0.0
  %136 = vmatprep.subr.mxu0 0.0
  %137 = vmatpush1.msra.mxu0 0.0
  %138 = vmatprep.subr.mxu0 0.0
  %139 = vmatpush1.msra.mxu0 0.0
  %140 = vmatprep.subr.mxu0 0.0
  %141 = vmatpush1.msra.mxu0 0.0
  %142 = vmatprep.subr.mxu0 0.0
  %143 = vmatpush1.msra.mxu0 0.0
  %144 = vmatprep.mubr.f32.mxu0 0.0
  %145 = vmatmul.mubr.f32.gmra.mrb[0].mxu0 %v56
  %v146 = vpop.f32.mrb[0].mxu0
  %v147 = vadd.f32 %v78, %v146
  %v148 = vpop.f32.mrb[0].mxu0
  %149 = vdwg.mxu0
  %v150 = vmax.f32 %v147, 0.0
  %v151 = vld [vmem:[%s5] sm:$0xff]
  %v152 = vld [vmem:[%s5 + $0x8] sm:$0xff]
  %v153 = vld [vmem:[%s5 + $0x10] sm:$0xff]
  %v154 = vld [vmem:[%s5 + $0x18] sm:$0xff]
  %v155 = vld [vmem:[%s5 + $0x20] sm:$0xff]
  %v156 = vld [vmem:[%s5 + $0x28] sm:$0xff]
  %v157 = vld [vmem:[%s5 + $0x30] sm:$0xff]
  %v158 = vld [vmem:[%s5 + $0x38] sm:$0xff]
  %v159 = vld [vmem:[%s5 + $0x40] sm:$0xff]
  %v160 = vld [vmem:[%s5 + $0x48] sm:$0xff]
  %v161 = vld [vmem:[%s5 + $0x50] sm:$0xff]
  %v162 = vld [vmem:[%s5 + $0x58] sm:$0xff]
  %v163 = vld [vmem:[%s5 + $0x60] sm:$0xff]
  %v164 = vld [vmem:[%s5 + $0x68] sm:$0xff]
  %v165 = vld [vmem:[%s5 + $0x70] sm:$0xff]
  %v166 = vld [vmem:[%s5 + $0x78] sm:$0xff]
  %v167 = vld [vmem:[%s6] sm:$0x1]
  %v169 = vlaneseq
  %v170 = vshrl.u32 %v169, 7
  %v171 = vsub.s32 0, %v170
  %v172 = vrot.slane %v167, %v171
  %174 = vmatprep.subr.mxu0 0.0
  %175 = vmatpush1.msra.mxu0 %v151
  %176 = vmatprep.subr.mxu0 0.0
  %177 = vmatpush1.msra.mxu0 %v152
  %178 = vmatprep.subr.mxu0 0.0
  %179 = vmatpush1.msra.mxu0 %v153
  %180 = vmatprep.subr.mxu0 0.0
  %181 = vmatpush1.msra.mxu0 %v154
  %182 = vmatprep.subr.mxu0 0.0
  %183 = vmatpush1.msra.mxu0 %v155
  %184 = vmatprep.subr.mxu0 0.0
  %185 = vmatpush1.msra.mxu0 %v156
  %186 = vmatprep.subr.mxu0 0.0
  %187 = vmatpush1.msra.mxu0 %v157
  %188 = vmatprep.subr.mxu0 0.0
  %189 = vmatpush1.msra.mxu0 %v158
  %190 = vmatprep.subr.mxu0 0.0
  %191 = vmatpush1.msra.mxu0 %v159
  %192 = vmatprep.subr.mxu0 0.0
  %193 = vmatpush1.msra.mxu0 %v160
  %194 = vmatprep.subr.mxu0 0.0
  %195 = vmatpush1.msra.mxu0 %v161
  %196 = vmatprep.subr.mxu0 0.0
  %197 = vmatpush1.msra.mxu0 %v162
  %198 = vmatprep.subr.mxu0 0.0
  %199 = vmatpush1.msra.mxu0 %v163
  %200 = vmatprep.subr.mxu0 0.0
  %201 = vmatpush1.msra.mxu0 %v164
  %202 = vmatprep.subr.mxu0 0.0
  %203 = vmatpush1.msra.mxu0 %v165
  %204 = vmatprep.subr.mxu0 0.0
  %205 = vmatpush1.msra.mxu0 %v166
  %206 = vmatprep.subr.mxu0 0.0
  %207 = vmatpush1.msra.mxu0 0.0
  %208 = vmatprep.subr.mxu0 0.0
  %209 = vmatpush1.msra.mxu0 0.0
  %210 = vmatprep.subr.mxu0 0.0
  %211 = vmatpush1.msra.mxu0 0.0
  %212 = vmatprep.subr.mxu0 0.0
  %213 = vmatpush1.msra.mxu0 0.0
  %214 = vmatprep.subr.mxu0 0.0
  %215 = vmatpush1.msra.mxu0 0.0
  %216 = vmatprep.subr.mxu0 0.0
  %217 = vmatpush1.msra.mxu0 0.0
  %218 = vmatprep.subr.mxu0 0.0
  %219 = vmatpush1.msra.mxu0 0.0
  %220 = vmatprep.subr.mxu0 0.0
  %221 = vmatpush1.msra.mxu0 0.0
  %222 = vmatprep.subr.mxu0 0.0
  %223 = vmatpush1.msra.mxu0 0.0
  %224 = vmatprep.subr.mxu0 0.0
  %225 = vmatpush1.msra.mxu0 0.0
  %226 = vmatprep.subr.mxu0 0.0
  %227 = vmatpush1.msra.mxu0 0.0
  %228 = vmatprep.subr.mxu0 0.0
  %229 = vmatpush1.msra.mxu0 0.0
  %230 = vmatprep.subr.mxu0 0.0
  %231 = vmatpush1.msra.mxu0 0.0
  %232 = vmatprep.subr.mxu0 0.0
  %233 = vmatpush1.msra.mxu0 0.0
  %234 = vmatprep.subr.mxu0 0.0
  %235 = vmatpush1.msra.mxu0 0.0
  %236 = vmatprep.subr.mxu0 0.0
  %237 = vmatpush1.msra.mxu0 0.0
  %238 = vmatprep.mubr.f32.mxu0 0.0
  %239 = vmatmul.mubr.f32.gmra.mrb[0].mxu0 %v150
  %v240 = vpop.f32.mrb[0].mxu0
  %v241 = vadd.f32 %v172, %v240
  %v242 = vpop.f32.mrb[0].mxu0
  %243 = vdwg.mxu0
  %vm244 = vcmask 64512
  %245 = vst.msk [vmem:[%s7] sm:$0xff] %vm244, %v241
  // Predicated region
  $region30: #{network_forward.1} parent=0 // pred_check
    _
  $region31: #{network_forward.1} parent=0 // pred_check_branch
    %247 = sbr.rel (0) target = $region33
  $region32: #{network_forward.1} parent=0 // pred_region
    _
  $region33: #{network_forward.1} parent=0 // pred_fallthru
    _
  // Predicated region
  $region34: #{network_forward.1} parent=0 // pred_check
    _
  $region35: #{network_forward.1} parent=0 // pred_check_branch
    %249 = sbr.rel (0) target = $region37
  $region36: #{network_forward.1} parent=0 // pred_region
    _
  $region37: #{network_forward.1} parent=0 // pred_fallthru
    _

</llo_original>
